<compile_context>
chip_gen: v6e
topology: v6e:2x2x1
jax: 0.10.0
libtpu: 0.0.40
codegen_flags: <defaults>
</compile_context>

<pallas_src>
import functools
import math

import jax
import jax.numpy as jnp
from jax import lax
from jax.experimental import pallas as pl
from jax.experimental.pallas import tpu as pltpu
from jax.scipy.special import logsumexp


_VMEM_BLOCK_BUDGET = 8 << 20      # bytes of blocks per kernel; safe on v5e/v6e/v7x
_VMEM_LIMIT_BYTES = 32 << 20      # scoped VMEM limit, <= physical on every gen


def _pick_tile_m(m, k, c, itemsize):
    """Rows of M per block for kernels 1/3, from a VMEM byte budget."""
    per_row = 2 * (k + c + 1) * max(itemsize, 4)        # double-buffered in + out
    budget_rows = max(128, _VMEM_BLOCK_BUDGET // per_row)
    if m <= budget_rows:
        return m                                        # single full block
    return max(128, (budget_rows // 128) * 128)         # lane/sublane aligned


def _pick_time_block(t, n_tile, c, itemsize):
    """Time steps per grid iteration for the recursion kernel."""
    per_step = c * n_tile * (2 * itemsize + 4)   # 2x double-buffered y + f32 staging
    budget_steps = max(16, _VMEM_BLOCK_BUDGET // per_step)
    if t <= budget_steps:
        return t                                 # full time dim -> always a legal block
    return max(16, (budget_steps // 16) * 16)    # multiple of 16 (ok for f32 and bf16)


# ---------------------------------------------------------------------------
# Kernel 1: y_cm = 5 * tanh(W @ x^T + b), shape (C, M); lane-dense over M.
# ---------------------------------------------------------------------------
def _linear_tanh_cm_kernel(x_ref, w_ref, b_ref, o_ref):
    # x: (TM, K); w: (C, K) [PyTorch layout, transpose folded into the dot];
    # b: (C, 1); o: (C, TM).
    acc = lax.dot_general(
        w_ref[...], x_ref[...],
        dimension_numbers=(((1,), (1,)), ((), ())),     # contract K with K
        preferred_element_type=jnp.float32)
    acc = acc + b_ref[...]                              # broadcast (C, 1)
    o_ref[...] = (5.0 * jnp.tanh(acc)).astype(o_ref.dtype)


def linear_tanh_cm(x2d, weight, bias):
    """x2d: (M, K); weight: (C, K); bias: (C,) -> y_cm: (C, M)."""
    m, k = x2d.shape
    c = weight.shape[0]
    b_col = bias.astype(jnp.float32).reshape(c, 1)
    tm = _pick_tile_m(m, k, c, jnp.dtype(x2d.dtype).itemsize)
    out_dtype = x2d.dtype

    cost = pl.CostEstimate(
        flops=2 * m * k * c,
        transcendentals=m * c,
        bytes_accessed=(x2d.size * x2d.dtype.itemsize
                        + weight.size * weight.dtype.itemsize
                        + c * 4 + m * c * jnp.dtype(out_dtype).itemsize))

    return pl.pallas_call(
        _linear_tanh_cm_kernel,
        out_shape=jax.ShapeDtypeStruct((c, m), out_dtype),
        grid_spec=pltpu.PrefetchScalarGridSpec(
            num_scalar_prefetch=0,
            grid=(pl.cdiv(m, tm),),
            in_specs=[
                pl.BlockSpec((tm, k), lambda i: (i, 0)),
                pl.BlockSpec((c, k), lambda i: (0, 0)),   # W resident in VMEM
                pl.BlockSpec((c, 1), lambda i: (0, 0)),
            ],
            out_specs=pl.BlockSpec((c, tm), lambda i: (0, i)),
        ),
        compiler_params=pltpu.CompilerParams(
            dimension_semantics=("parallel",),
            vmem_limit_bytes=_VMEM_LIMIT_BYTES),
        cost_estimate=cost,
    )(x2d, weight, b_col)


# ---------------------------------------------------------------------------
# Kernel 2: flip-flop global-norm forward recursion -> logZ per batch element.
# Batch on lanes; TB time steps per grid iteration; batch blocks "parallel".
# ---------------------------------------------------------------------------
def _flipflop_kernel(y_ref, logz_ref, stage_ref, fwd_ref, *, nbase, t_total, tb):
    nff = 2 * nbase
    ti = pl.program_id(1)                       # time-block index (sequential)

    @pl.when(ti == 0)
    def _():
        # fwd = zeros; logZ = logsumexp(fwd) = log(2*nbase); fwd -= logZ
        logz_ref[...] = jnp.full(logz_ref.shape, math.log(nff), jnp.float32)
        fwd_ref[...] = jnp.full(fwd_ref.shape, -math.log(nff), jnp.float32)

    # Upcast the whole (C, TB, TN) block once (static offsets -> safe for bf16
    # y); per-step dynamic slices below then read 32-bit data.
    stage_ref[...] = y_ref[...].astype(jnp.float32)

    t0 = ti * tb

    def step(s, carry):
        fwd, logz = carry                        # (nff, 1, TN), (1, 1, TN)
        v = stage_ref[:, pl.ds(s, 1), :]         # (C, 1, TN): one step, batch on lanes

        # base1[k] = logsumexp_j (fwd[j] + v[k*nff + j]),  k < nbase
        cols = []
        for kk in range(nbase):                  # nbase is tiny; unrolled at trace time
            sk = fwd + v[kk * nff:(kk + 1) * nff]            # (nff, 1, TN)
            mx = jnp.max(sk, axis=0, keepdims=True)
            cols.append(mx + jnp.log(jnp.sum(jnp.exp(sk - mx), axis=0, keepdims=True)))

        # base2[i] = logaddexp(last[i], last[nbase + i])
        last = fwd + v[nbase * nff:(nbase + 1) * nff]        # (nff, 1, TN)
        a = last[:nbase]
        b = last[nbase:]
        base2 = jnp.maximum(a, b) + jnp.log1p(jnp.exp(-jnp.abs(a - b)))

        new_state = jnp.concatenate(cols + [base2], axis=0)  # (nff, 1, TN)
        mx2 = jnp.max(new_state, axis=0, keepdims=True)
        factors = mx2 + jnp.log(jnp.sum(jnp.exp(new_state - mx2),
                                        axis=0, keepdims=True))  # (1, 1, TN)

        valid = t0 + s < t_total                 # mask padded steps of the last block
        fwd = jnp.where(valid, new_state - factors, fwd)
        logz = jnp.where(valid, logz + factors, logz)
        return fwd, logz

    fwd, logz = lax.fori_loop(0, tb, step, (fwd_ref[...], logz_ref[...]))
    fwd_ref[...] = fwd
    logz_ref[...] = logz


def flipflop_logz(y3, nbase):
    """y3: (C, T, N) flip-flop scores (batch on lanes) -> logZ: (1, N) f32."""
    c, t_len, n = y3.shape
    nff = 2 * nbase
    tn = n if n <= 128 else 128
    tb = _pick_time_block(t_len, tn, c, jnp.dtype(y3.dtype).itemsize)

    logz = pl.pallas_call(
        functools.partial(_flipflop_kernel, nbase=nbase, t_total=t_len, tb=tb),
        out_shape=jax.ShapeDtypeStruct((1, 1, n), jnp.float32),
        grid_spec=pltpu.PrefetchScalarGridSpec(
            num_scalar_prefetch=0,
            grid=(pl.cdiv(n, tn), pl.cdiv(t_len, tb)),
            in_specs=[pl.BlockSpec((c, tb, tn), lambda b, i: (0, i, b))],
            out_specs=pl.BlockSpec((1, 1, tn), lambda b, i: (0, 0, b)),
            scratch_shapes=[
                pltpu.VMEM((c, tb, tn), jnp.float32),    # f32 staging of the y block
                pltpu.VMEM((nff, 1, tn), jnp.float32),   # fwd state, persists over time
            ],
        ),
        compiler_params=pltpu.CompilerParams(
            # Batch blocks are independent (megacore on v7x); time is the
            # sequential recursion axis.
            dimension_semantics=("parallel", "arbitrary"),
            vmem_limit_bytes=_VMEM_LIMIT_BYTES),
    )(y3)
    return logz.reshape(1, n)


# ---------------------------------------------------------------------------
# Kernel 3: out = 5*tanh(x @ W^T + b) - logZ/T, shape (M, C) -> (T, N, C).
# Recomputes y from x (no extra HBM pass over y_cm), fusing the correction.
# ---------------------------------------------------------------------------
def _linear_tanh_sub_kernel(x_ref, w_ref, b_ref, corr_ref, o_ref):
    # x: (TM, K); w: (C, K); b: (1, C); corr: (TM, 1); o: (TM, C)
    acc = lax.dot_general(
        x_ref[...], w_ref[...],
        dimension_numbers=(((1,), (1,)), ((), ())),
        preferred_element_type=jnp.float32)
    acc = acc + b_ref[...]
    o_ref[...] = (5.0 * jnp.tanh(acc) - corr_ref[...]).astype(o_ref.dtype)


def linear_tanh_sub(x2d, weight, bias, corr, out_dtype):
    """out = 5*tanh(x @ W^T + b) - corr; x2d: (M, K); corr: (M, 1)."""
    m, k = x2d.shape
    c = weight.shape[0]
    b_row = bias.astype(jnp.float32).reshape(1, c)
    tm = _pick_tile_m(m, k, c, jnp.dtype(x2d.dtype).itemsize)

    cost = pl.CostEstimate(
        flops=2 * m * k * c,
        transcendentals=m * c,
        bytes_accessed=(x2d.size * x2d.dtype.itemsize
                        + weight.size * weight.dtype.itemsize
                        + (m + c) * 4 + m * c * jnp.dtype(out_dtype).itemsize))

    return pl.pallas_call(
        _linear_tanh_sub_kernel,
        out_shape=jax.ShapeDtypeStruct((m, c), out_dtype),
        grid_spec=pltpu.PrefetchScalarGridSpec(
            num_scalar_prefetch=0,
            grid=(pl.cdiv(m, tm),),
            in_specs=[
                pl.BlockSpec((tm, k), lambda i: (i, 0)),
                pl.BlockSpec((c, k), lambda i: (0, 0)),   # W resident in VMEM
                pl.BlockSpec((1, c), lambda i: (0, 0)),
                pl.BlockSpec((tm, 1), lambda i: (i, 0)),
            ],
            out_specs=pl.BlockSpec((tm, c), lambda i: (i, 0)),
        ),
        compiler_params=pltpu.CompilerParams(
            dimension_semantics=("parallel",),
            vmem_limit_bytes=_VMEM_LIMIT_BYTES),
        cost_estimate=cost,
    )(x2d, weight, b_row, corr)


# ---------------------------------------------------------------------------
# Full module forward
# ---------------------------------------------------------------------------
def global_norm_flipflop_forward(x, weight, bias, nbase, *, use_bf16_inputs=False):
    """x: (T, N, insize); weight: (C, insize) [PyTorch layout]; bias: (C,)."""
    t_len, n, insize = x.shape
    c = 2 * nbase * (nbase + 1)
    assert weight.shape == (c, insize)
    m = t_len * n

    # Optionally feed the MXU in bf16 (f32 accumulation) and keep y in bf16.
    mx_dtype = jnp.bfloat16 if use_bf16_inputs else x.dtype
    x2d = x.reshape(m, insize).astype(mx_dtype)
    w_mx = weight.astype(mx_dtype)

    # K1: y in (C, M) layout (lane-dense stores; time*batch on lanes).
    y_cm = linear_tanh_cm(x2d, w_mx, bias)                 # (C, M)

    # K2: global-norm flip-flop recursion -> logZ per batch element.
    y3 = y_cm.reshape(c, t_len, n)                         # free row-major view
    logz = flipflop_logz(y3, nbase)                        # (1, N) f32

    # K3: recompute y in (T, N, C) orientation with the -logZ/T subtract fused.
    corr = jnp.broadcast_to(logz * (1.0 / t_len), (t_len, n)).reshape(m, 1)
    out2d = linear_tanh_sub(x2d, w_mx, bias, corr, out_dtype=x.dtype)
    return out2d.reshape(t_len, n, c)


def make_params(key, insize, size, has_bias=True):
    """Deterministic init mirroring reset_parameters():
    W ~ truncnorm(-2, 2) * 0.5 / sqrt(insize + size);  b ~ truncnorm(-2, 2) * 0.5
    """
    kw, kb = jax.random.split(key)
    w = (jax.random.truncated_normal(kw, -2.0, 2.0, (size, insize), jnp.float32)
         * 0.5 / math.sqrt(insize + size))
    if has_bias:
        b = jax.random.truncated_normal(kb, -2.0, 2.0, (size,), jnp.float32) * 0.5
    else:
        b = jnp.zeros((size,), jnp.float32)
    return w, b


# ---------------------------------------------------------------------------
# Pure-JAX reference (mirrors the PyTorch module exactly)
# ---------------------------------------------------------------------------
def _reference_forward(x, weight, bias, nbase):
    y = 5.0 * jnp.tanh(
        jnp.einsum("tbi,oi->tbo", x, weight, precision=lax.Precision.HIGHEST) + bias)
    t_len, n, _ = y.shape
    nff = 2 * nbase
    fwd = jnp.zeros((n, nff), jnp.float32)
    logz = logsumexp(fwd, axis=1, keepdims=True)
    fwd = fwd - logz

    def step(carry, y_t):
        fwd, logz = carry
        scores = fwd[:, None, :] + y_t.reshape(n, nbase + 1, nff)
        base1 = logsumexp(scores[:, :nbase], axis=2)
        a = scores[:, nbase, :nbase]
        b = scores[:, nbase, nbase:]
        base2 = jnp.maximum(a, b) + jnp.log1p(jnp.exp(-jnp.abs(a - b)))
        new_state = jnp.concatenate([base1, base2], axis=1)
        factors = logsumexp(new_state, axis=1, keepdims=True)
        return (new_state - factors, logz + factors), None

    (fwd, logz), _ = lax.scan(step, (fwd, logz), y)
    return y - logz / t_len


if __name__ == "__main__":
    key = jax.random.PRNGKey(0)
    k_x, k_p = jax.random.split(key)

    # Small shapes: seq(T)=8, batch(N)=2, insize=32, nbase=4 -> size=40
    T, N, insize, nbase = 8, 2, 32, 4
    size = 2 * nbase * (nbase + 1)

    x = jax.random.normal(k_x, (T, N, insize), jnp.float32)
    weight, bias = make_params(k_p, insize, size, has_bias=True)

    ref = _reference_forward(x, weight, bias, nbase)

    # f32 path: strict check.
    out = global_norm_flipflop_forward(x, weight, bias, nbase)
    out = jax.block_until_ready(out)
    assert out.shape == (T, N, size)
    assert jnp.allclose(out, ref, atol=1e-4, rtol=1e-4), (
        "f32 mismatch vs reference: max abs err = "
        f"{float(jnp.max(jnp.abs(out - ref)))}")

    # bf16 MXU / bf16-resident-y path (recommended on v6e/v7x): loose tolerance.
    out_bf16 = global_norm_flipflop_forward(x, weight, bias, nbase,
                                            use_bf16_inputs=True)
    out_bf16 = jax.block_until_ready(out_bf16)
    assert jnp.allclose(out_bf16, ref, atol=0.15, rtol=0.05), (
        "bf16 mismatch vs reference: max abs err = "
        f"{float(jnp.max(jnp.abs(out_bf16 - ref)))}")

    print("KERNEL_OK")
</pallas_src>

<mosaic_0001>
module attributes {stable_mosaic.version = 11 : i64} {
  func.func @_linear_tanh_cm_kernel(%arg0: i32, %arg1: memref<16x32xf32, #tpu.memory_space<vmem>>, %arg2: memref<40x32xf32, #tpu.memory_space<vmem>>, %arg3: memref<40x1xf32, #tpu.memory_space<vmem>>, %arg4: memref<40x16xf32, #tpu.memory_space<vmem>>) attributes {dimension_semantics = [#tpu.dimension_semantics<parallel>], iteration_bounds = array<i64: 1>, scalar_prefetch = 0 : i64, scratch_operands = 0 : i64, tpu.core_type = #tpu.core_type<tc>, window_params = [{transform_indices = @transform_0, window_bounds = array<i64: 16, 32>}, {pipeline_mode = #tpu.pipeline_mode<synchronous>, transform_indices = @transform_1, window_bounds = array<i64: 40, 32>}, {pipeline_mode = #tpu.pipeline_mode<synchronous>, transform_indices = @transform_2, window_bounds = array<i64: 40, 1>}, {transform_indices = @transform_3, window_bounds = array<i64: 40, 16>}]} {
    %c0 = arith.constant 0 : index
    %c0_0 = arith.constant 0 : index
    %0 = vector.load %arg2[%c0, %c0_0] : memref<40x32xf32, #tpu.memory_space<vmem>>, vector<40x32xf32>
    %c0_1 = arith.constant 0 : index
    %c0_2 = arith.constant 0 : index
    %1 = vector.load %arg1[%c0_1, %c0_2] : memref<16x32xf32, #tpu.memory_space<vmem>>, vector<16x32xf32>
    %cst = arith.constant dense<0.000000e+00> : vector<40x16xf32>
    %2 = tpu.matmul %0, %1, %cst {dimension_numbers = #tpu.dot_dimension_numbers<[1], [1], [0], [0], [0, 0, 1, 0], [], []>} : vector<40x32xf32>, vector<16x32xf32>, vector<40x16xf32> -> vector<40x16xf32>
    %c0_3 = arith.constant 0 : index
    %c0_4 = arith.constant 0 : index
    %3 = vector.load %arg3[%c0_3, %c0_4] : memref<40x1xf32, #tpu.memory_space<vmem>>, vector<40x1xf32>
    %4 = vector.broadcast %3 : vector<40x1xf32> to vector<40x16xf32>
    %5 = arith.addf %2, %4 : vector<40x16xf32>
    %6 = math.tanh %5 : vector<40x16xf32>
    %cst_5 = arith.constant 5.000000e+00 : f32
    %7 = vector.broadcast %cst_5 : f32 to vector<40x16xf32>
    %8 = arith.mulf %7, %6 : vector<40x16xf32>
    %c0_6 = arith.constant 0 : index
    %c0_7 = arith.constant 0 : index
    %9 = vector.load %arg4[%c0_6, %c0_7] : memref<40x16xf32, #tpu.memory_space<vmem>>, vector<40x16xf32>
    tpu.vector_store %arg4[%c0_6, %c0_7], %8 {strides = array<i32>} : memref<40x16xf32, #tpu.memory_space<vmem>>, vector<40x16xf32>,
    return
  }
  func.func @transform_0(%arg0: i32) -> (i32, i32) {
    %c0_i32 = arith.constant 0 : i32
    %c0_i32_0 = arith.constant 0 : i32
    return %arg0, %c0_i32 : i32, i32
  }
  func.func @transform_1(%arg0: i32) -> (i32, i32) {
    %c0_i32 = arith.constant 0 : i32
    %c0_i32_0 = arith.constant 0 : i32
    %c0_i32_1 = arith.constant 0 : i32
    return %c0_i32, %c0_i32_0 : i32, i32
  }
  func.func @transform_2(%arg0: i32) -> (i32, i32) {
    %c0_i32 = arith.constant 0 : i32
    %c0_i32_0 = arith.constant 0 : i32
    %c0_i32_1 = arith.constant 0 : i32
    return %c0_i32, %c0_i32_0 : i32, i32
  }
  func.func @transform_3(%arg0: i32) -> (i32, i32) {
    %c0_i32 = arith.constant 0 : i32
    %c0_i32_0 = arith.constant 0 : i32
    return %c0_i32, %arg0 : i32, i32
  }
}

</mosaic_0001>

<llo_original>
// kernel: tpu_custom_call.1
$region0: #{tpu_custom_call.1}
  #allocation0 [shape = 'u32[]', space=smem, size = 0x4, offset = 0x4, fixed_abs, tag = 'smem constant byte address 0x4 - core index']
  #allocation1 [shape = 'u32[144,128]{1,0:T(1,128)}', space=vmem, size = 0x12000, scoped, tag = 'internal scratch']
  %s0 = inlined_call_operand.vmem [shape: f32[16,32], index: 0, kind: input, shape index: {}]
  %s1 = inlined_call_operand.vmem [shape: f32[40,32], index: 1, kind: input, shape index: {}]
  %s2 = inlined_call_operand.vmem [shape: f32[40,1], index: 2, kind: input, shape index: {}]
  %s3 = inlined_call_operand.vmem [shape: f32[40,16], index: 3, kind: output, shape index: {}]
  %s4 = sld [smem:[#allocation0]]
  $region22: #{tpu_custom_call.1} parent=0
    _
  %s6 = ssub.s32 1, %s4
  %s7 = scalar_select 0, %s6, %s4
  // Predicated region
  $region2: #{tpu_custom_call.1} parent=0 // pred_check
    _
  $region3: #{tpu_custom_call.1} parent=0 // pred_check_branch
    %9 = sbr.rel (0) target = $region5
  $region4: #{tpu_custom_call.1} parent=0 // pred_region
    _
  $region5: #{tpu_custom_call.1} parent=0 // pred_fallthru
    _
  // Predicated region
  $region6: #{tpu_custom_call.1} parent=0 // pred_check
    _
  $region7: #{tpu_custom_call.1} parent=0 // pred_check_branch
    %11 = sbr.rel (0) target = $region9
  $region8: #{tpu_custom_call.1} parent=0 // pred_region
    _
  $region9: #{tpu_custom_call.1} parent=0 // pred_fallthru
    _
  // Predicated region
  $region10: #{tpu_custom_call.1} parent=0 // pred_check
    _
  $region11: #{tpu_custom_call.1} parent=0 // pred_check_branch
    %13 = sbr.rel (0) target = $region13
  $region12: #{tpu_custom_call.1} parent=0 // pred_region
    _
  $region13: #{tpu_custom_call.1} parent=0 // pred_fallthru
    _
  %v14 = vld [vmem:[%s1] sm:$0xff]
  %v15 = vld [vmem:[%s1 + $0x8] sm:$0xff]
  %v16 = vld [vmem:[%s1 + $0x10] sm:$0xff]
  %v17 = vld [vmem:[%s1 + $0x18] sm:$0xff]
  %v18 = vld [vmem:[%s1 + $0x20] sm:$0xff]
  %v19 = vld [vmem:[%s0] sm:$0xff]
  %v20 = vld [vmem:[%s0 + $0x8] sm:$0xff]
  %v21 = vld [vmem:[%s2] sm:$0xff]
  %v22 = vld [vmem:[%s2 + $0x8] sm:$0xff]
  %v23 = vld [vmem:[%s2 + $0x10] sm:$0xff]
  %v24 = vld [vmem:[%s2 + $0x18] sm:$0xff]
  %v25 = vld [vmem:[%s2 + $0x20] sm:$0xff]
  %27 = vset.pattern.permute.xlu0 0
  %28 = vperm.xlu0 %27, %v21
  %v29 = vpop.permute.xlu0 %28
  %32 = vset.pattern.permute.xlu0 0
  %33 = vperm.xlu0 %32, %v22
  %v34 = vpop.permute.xlu0 %33
  %37 = vset.pattern.permute.xlu0 0
  %38 = vperm.xlu0 %37, %v23
  %v39 = vpop.permute.xlu0 %38
  %42 = vset.pattern.permute.xlu0 0
  %43 = vperm.xlu0 %42, %v24
  %v44 = vpop.permute.xlu0 %43
  %47 = vset.pattern.permute.xlu0 0
  %48 = vperm.xlu0 %47, %v25
  %v49 = vpop.permute.xlu0 %48
  %vm51 = vcmask 261120
  %v53 = vsel %vm51, %v14, 0
  %v56 = vsel %vm51, %v15, 0
  %v59 = vsel %vm51, %v16, 0
  %v62 = vsel %vm51, %v17, 0
  %v65 = vsel %vm51, %v18, 0
  %v68 = vsel %vm51, %v19, 0
  %v71 = vsel %vm51, %v20, 0
  %73 = vmatprep.subr.mxu0 0.0
  %74 = vmatpush1.xpose.msra.mxu0 0.0
  %75 = vmatprep.subr.mxu0 0.0
  %76 = vmatpush1.xpose.msra.mxu0 0.0
  %77 = vmatprep.subr.mxu0 0.0
  %78 = vmatpush1.xpose.msra.mxu0 0.0
  %79 = vmatprep.subr.mxu0 0.0
  %80 = vmatpush1.xpose.msra.mxu0 0.0
  %81 = vmatprep.subr.mxu0 0.0
  %82 = vmatpush1.xpose.msra.mxu0 0.0
  %83 = vmatprep.subr.mxu0 0.0
  %84 = vmatpush1.xpose.msra.mxu0 0.0
  %85 = vmatprep.subr.mxu0 0.0
  %86 = vmatpush1.xpose.msra.mxu0 0.0
  %87 = vmatprep.subr.mxu0 0.0
  %88 = vmatpush1.xpose.msra.mxu0 0.0
  %89 = vmatprep.subr.mxu0 0.0
  %90 = vmatpush1.xpose.msra.mxu0 0.0
  %91 = vmatprep.subr.mxu0 0.0
  %92 = vmatpush1.xpose.msra.mxu0 0.0
  %93 = vmatprep.subr.mxu0 0.0
  %94 = vmatpush1.xpose.msra.mxu0 0.0
  %95 = vmatprep.subr.mxu0 0.0
  %96 = vmatpush1.xpose.msra.mxu0 0.0
  %97 = vmatprep.subr.mxu0 0.0
  %98 = vmatpush1.xpose.msra.mxu0 0.0
  %99 = vmatprep.subr.mxu0 0.0
  %100 = vmatpush1.xpose.msra.mxu0 0.0
  %101 = vmatprep.subr.mxu0 0.0
  %102 = vmatpush1.xpose.msra.mxu0 %v71
  %103 = vmatprep.subr.mxu0 0.0
  %104 = vmatpush1.xpose.msra.mxu0 %v68
  %105 = vmatprep.subr.mxu0 0.0
  %106 = vmatpush2.xpose.msra.mxu0 0.0
  %107 = vmatprep.subr.mxu0 0.0
  %108 = vmatpush2.xpose.msra.mxu0 0.0
  %109 = vmatprep.subr.mxu0 0.0
  %110 = vmatpush2.xpose.msra.mxu0 0.0
  %111 = vmatprep.subr.mxu0 0.0
  %112 = vmatpush2.xpose.msra.mxu0 0.0
  %113 = vmatprep.subr.mxu0 0.0
  %114 = vmatpush2.xpose.msra.mxu0 0.0
  %115 = vmatprep.subr.mxu0 0.0
  %116 = vmatpush2.xpose.msra.mxu0 0.0
  %117 = vmatprep.subr.mxu0 0.0
  %118 = vmatpush2.xpose.msra.mxu0 0.0
  %119 = vmatprep.subr.mxu0 0.0
  %120 = vmatpush2.xpose.msra.mxu0 0.0
  %121 = vmatprep.subr.mxu0 0.0
  %122 = vmatpush2.xpose.msra.mxu0 0.0
  %123 = vmatprep.subr.mxu0 0.0
  %124 = vmatpush2.xpose.msra.mxu0 0.0
  %125 = vmatprep.subr.mxu0 0.0
  %126 = vmatpush2.xpose.msra.mxu0 0.0
  %127 = vmatprep.subr.mxu0 0.0
  %128 = vmatpush2.xpose.msra.mxu0 0.0
  %129 = vmatprep.subr.mxu0 0.0
  %130 = vmatpush2.xpose.msra.mxu0 0.0
  %131 = vmatprep.subr.mxu0 0.0
  %132 = vmatpush2.xpose.msra.mxu0 0.0
  %133 = vmatprep.subr.mxu0 0.0
  %134 = vmatpush2.xpose.msra.mxu0 0.0
  %135 = vmatprep.subr.mxu0 0.0
  %136 = vmatpush2.xpose.msra.mxu0 0.0
  %137 = vmatprep.mubr.f32.mxu0 0.0
  %138 = vmatmul.mubr.f32.gmra.mxu0 %v53
  %v139 = vpop.f32.mrf.mxu0
  %v140 = vadd.f32 %v29, %v139
  %v141 = vpop.f32.mrf.mxu0
  %142 = vmatprep.mubr.f32.mxu0 0.0
  %143 = vmatmul.mubr.f32.gmra.mxu0 %v56
  %v144 = vpop.f32.mrf.mxu0
  %v145 = vadd.f32 %v34, %v144
  %v146 = vpop.f32.mrf.mxu0
  %147 = vmatprep.mubr.f32.mxu0 0.0
  %148 = vmatmul.mubr.f32.gmra.mxu0 %v59
  %v149 = vpop.f32.mrf.mxu0
  %v150 = vadd.f32 %v39, %v149
  %v151 = vpop.f32.mrf.mxu0
  %152 = vmatprep.mubr.f32.mxu0 0.0
  %153 = vmatmul.mubr.f32.gmra.mxu0 %v62
  %v154 = vpop.f32.mrf.mxu0
  %v155 = vadd.f32 %v44, %v154
  %v156 = vpop.f32.mrf.mxu0
  %157 = vmatprep.mubr.f32.mxu0 0.0
  %158 = vmatmul.mubr.f32.gmra.mxu0 %v65
  %v159 = vpop.f32.mrf.mxu0
  %v160 = vadd.f32 %v49, %v159
  %v161 = vpop.f32.mrf.mxu0
  %162 = vdwg.mxu0
  %v163 = vtanh.pop %v140
  %v164 = vtanh.pop %v145
  %v165 = vtanh.pop %v150
  %v166 = vtanh.pop %v155
  %v167 = vtanh.pop %v160
  %v168 = vmul.f32 %v163, 5.0
  %v169 = vmul.f32 %v164, 5.0
  %v170 = vmul.f32 %v165, 5.0
  %v171 = vmul.f32 %v166, 5.0
  %v172 = vmul.f32 %v167, 5.0
  %vm173 = vcmask 130048
  %174 = vst.msk [vmem:[%s3] sm:$0xff] %vm173, %v168
  %175 = vst.msk [vmem:[%s3 + $0x8] sm:$0xff] %vm173, %v169
  %176 = vst.msk [vmem:[%s3 + $0x10] sm:$0xff] %vm173, %v170
  %177 = vst.msk [vmem:[%s3 + $0x18] sm:$0xff] %vm173, %v171
  %178 = vst.msk [vmem:[%s3 + $0x20] sm:$0xff] %vm173, %v172
  // Predicated region
  $region14: #{tpu_custom_call.1} parent=0 // pred_check
    _
  $region15: #{tpu_custom_call.1} parent=0 // pred_check_branch
    %180 = sbr.rel (0) target = $region17
  $region16: #{tpu_custom_call.1} parent=0 // pred_region
    _
  $region17: #{tpu_custom_call.1} parent=0 // pred_fallthru
    _
  // Predicated region
  $region18: #{tpu_custom_call.1} parent=0 // pred_check
    _
  $region19: #{tpu_custom_call.1} parent=0 // pred_check_branch
    %182 = sbr.rel (0) target = $region21
  $region20: #{tpu_custom_call.1} parent=0 // pred_region
    _
  $region21: #{tpu_custom_call.1} parent=0 // pred_fallthru
    _

</llo_original>
